<compile_context>
chip_gen: v7x
topology: tpu7x:2x2x1
jax: 0.10.0
libtpu: 0.0.40
codegen_flags: <defaults>
</compile_context>

<pallas_src>
import functools

import jax
import jax.numpy as jnp
from jax.experimental import pallas as pl
from jax.experimental.pallas import tpu as pltpu


def _round_up(x: int, m: int) -> int:
    return (x + m - 1) // m * m


def _device_kind() -> str:
    try:
        return jax.devices()[0].device_kind.lower()
    except Exception:
        return ""


def _default_bf16_h() -> bool:
    # bf16 VALU exists on v6e / v7x; v5e (and older) have no bf16 VPU -> keep f32 there.
    k = _device_kind()
    return ("v6" in k) or ("v7" in k) or ("7x" in k)


def _num_tensorcores() -> int:
    # Chips whose TensorCores are sharded by a "parallel" grid axis: v7x (2 TC/chip)
    # and the megacore generations (v4 / v5p). v5e / v6e are single-TC.
    k = _device_kind()
    if ("v7" in k) or ("7x" in k):
        return 2
    if ("v4" in k) or ("v5p" in k):
        return 2
    return 1


def _choose_tile(n: int, tile_n: int, num_cores: int) -> int:
    """Pick a node-tile (multiple of 128, lane-dense output) balancing step overhead
    vs. TensorCore sharding."""
    tile = max(128, _round_up(tile_n, 128))
    tile = min(tile, _round_up(n, 128))            # 1-TC chips: collapse small N to 1 step
    if num_cores > 1 and n > 128:
        # Keep the "parallel" grid axis shardable: at least num_cores steps, and a step
        # count that is a multiple of num_cores so no core sits idle with an odd tail.
        tile = min(tile, _round_up(pl.cdiv(n, num_cores), 128))
        steps = _round_up(pl.cdiv(n, tile), num_cores)
        tile = max(128, _round_up(pl.cdiv(n, steps), 128))
    return tile


def _node_head_kernel(x_ref, w1_ref, b1_ref, w2t_ref, b2_ref, o_ref, *, bf16_h):
    # x_ref:   (tile, D)   streamed node tile (cast to bf16 here for the MXU; no-op if
    #                      the producer already emits bf16)
    # w1_ref:  (D, C*H)    flattened first-layer weights (bf16, resident)
    # b1_ref:  (1, C*H)    flattened first-layer biases (bf16 on v6e/v7x, f32 on v5e)
    # w2t_ref: (C, C*H)    block-diagonal second-layer weights, pre-transposed (bf16)
    # b2_ref:  (C, 1)      second-layer biases (f32)
    # o_ref:   (C, tile)   logits: classes on sublanes, nodes on lanes (lane-dense store)
    x = x_ref[...].astype(jnp.bfloat16)

    if bf16_h:
        # v6e/v7x: bf16 VALU -> keep the (tile, C*H) intermediate bf16 end to end
        # (halves the elementwise bias/ReLU work and the h scratch traffic).
        h = jnp.dot(x, w1_ref[...], preferred_element_type=jnp.bfloat16)
        h = jnp.maximum(h + b1_ref[...], 0)
    else:
        # v5e (no bf16 VALU): f32 bias-add/ReLU; cast to bf16 only for the 2nd MXU pass.
        h = jnp.dot(x, w1_ref[...], preferred_element_type=jnp.float32)
        h = jnp.maximum(h + b1_ref[...], 0.0).astype(jnp.bfloat16)

    # Layer 2: block-diagonal weight -> single full-K (=C*H) contraction producing
    # (C, tile); classes on sublanes, nodes on lanes -> lane-dense output store.
    logits = jnp.einsum("ck,nk->cn", w2t_ref[...], h,
                        preferred_element_type=jnp.float32)
    o_ref[...] = logits + b2_ref[...]               # (C, 1) broadcasts along lanes


@functools.partial(
    jax.jit, static_argnames=("tile_n", "class_major", "bf16_h", "num_cores"))
def _node_classifier_head_impl(node_embedding, w1, b1, w2, b2, *,
                               tile_n, class_major, bf16_h, num_cores):
    # TODO(synk): ClassifierHead dropout (input_dropout/layer_dropout > 0) and
    # n_layers != 2 are not implemented; the module defaults (0.0 dropout, 2 layers)
    # are what this kernel reproduces.
    N, D = node_embedding.shape
    C, D2, H = w1.shape
    assert D2 == D
    CH = C * H

    # --- weight re-layout (tiny, traced once under jit) ---
    h_dtype = jnp.bfloat16 if bf16_h else jnp.float32
    w1_flat = jnp.transpose(w1, (1, 0, 2)).reshape(D, CH).astype(jnp.bfloat16)
    b1_flat = b1.reshape(1, CH).astype(h_dtype)
    eye = jnp.eye(C, dtype=jnp.float32)
    w2t = (eye[:, :, None] * w2[None].astype(jnp.float32)).reshape(C, CH)
    w2t = w2t.astype(jnp.bfloat16)
    b2_col = b2.reshape(C, 1).astype(jnp.float32)

    # --- tiling: big, lane-dense tiles; ragged N handled by partial blocks (no pad) ---
    tile = _choose_tile(N, tile_n, num_cores)
    grid = (pl.cdiv(N, tile),)

    kernel = functools.partial(_node_head_kernel, bf16_h=bf16_h)
    out_cm = pl.pallas_call(
        kernel,
        out_shape=jax.ShapeDtypeStruct((C, N), jnp.float32),
        grid_spec=pltpu.PrefetchScalarGridSpec(
            num_scalar_prefetch=0,
            grid=grid,
            in_specs=[
                pl.BlockSpec((tile, D), lambda i: (i, 0)),   # streamed node tile
                # Weights/biases: constant block index -> fetched once, revisited every
                # step. No K/D grid axis: no compute slot is near saturation here, so
                # extra sequential grid axes would be pure step overhead.
                # TODO(synk): pipeline_mode=pl.Buffered(1) on these would drop their
                # redundant second VMEM buffer (~tens of KiB) — skipped to stay on the
                # vanilla, universally-supported BlockSpec path.
                pl.BlockSpec((D, CH), lambda i: (0, 0)),     # W1 flat (bf16)
                pl.BlockSpec((1, CH), lambda i: (0, 0)),     # b1 flat
                pl.BlockSpec((C, CH), lambda i: (0, 0)),     # W2 block-diag^T (bf16)
                pl.BlockSpec((C, 1), lambda i: (0, 0)),      # b2 column
            ],
            out_specs=pl.BlockSpec((C, tile), lambda i: (0, i)),
        ),
        compiler_params=pltpu.CompilerParams(
            dimension_semantics=("parallel",)
        ),
    )(node_embedding, w1_flat, b1_flat, w2t, b2_col)

    if class_major:
        return out_cm        # (C, N): lane-dense, no extra transpose pass
    return out_cm.T          # (N, C): module-identical layout


def node_classifier_head(node_embedding, w1, b1, w2, b2, *,
                         tile_n=4096, class_major=False,
                         bf16_h=None, num_cores=None):
    """Fused NodeClassifierHead forward.

    node_embedding: (N, D); w1: (C, D, H); b1: (C, H); w2: (C, H); b2: (C,)
    Returns (N, C) float32 logits (or (C, N) if class_major=True, which skips the
    wrapper-side transpose pass for consumers that can read class-major logits).
    """
    if bf16_h is None:
        bf16_h = _default_bf16_h()
    if num_cores is None:
        num_cores = _num_tensorcores()
    return _node_classifier_head_impl(
        node_embedding, w1, b1, w2, b2,
        tile_n=tile_n, class_major=class_major,
        bf16_h=bf16_h, num_cores=num_cores)


def _init_params(key, latent_dim, nr_classes):
    """Deterministic per-head params, PyTorch-Linear-style uniform init."""
    hidden = latent_dim  # ClassifierHead default: hidden_dim = input_dim
    k1, k2, k3, k4 = jax.random.split(key, 4)
    bound1 = 1.0 / jnp.sqrt(latent_dim)
    bound2 = 1.0 / jnp.sqrt(hidden)
    w1 = jax.random.uniform(k1, (nr_classes, latent_dim, hidden), jnp.float32,
                            -bound1, bound1)
    b1 = jax.random.uniform(k2, (nr_classes, hidden), jnp.float32, -bound1, bound1)
    w2 = jax.random.uniform(k3, (nr_classes, hidden), jnp.float32, -bound2, bound2)
    b2 = jax.random.uniform(k4, (nr_classes,), jnp.float32, -bound2, bound2)
    return w1, b1, w2, b2


def _reference(x, w1, b1, w2, b2):
    """Plain-JAX f32 reference matching the PyTorch loop over separate heads."""
    cols = []
    for c in range(w1.shape[0]):
        h = jnp.maximum(x @ w1[c] + b1[c], 0.0)
        cols.append(h @ w2[c] + b2[c])
    return jnp.stack(cols, axis=1)


def _reference_kernel_precision(x, w1, b1, w2, b2, *, bf16_h):
    """Reference emulating the kernel's dtype path (bf16 x / W1 / W2, bf16-or-f32 h)."""
    f32 = jnp.float32
    xb = x.astype(jnp.bfloat16).astype(f32)
    cols = []
    for c in range(w1.shape[0]):
        w1b = w1[c].astype(jnp.bfloat16).astype(f32)
        pre = xb @ w1b                                   # f32 MXU accumulation
        if bf16_h:
            hb = pre.astype(jnp.bfloat16) + b1[c].astype(jnp.bfloat16)
            h = jnp.maximum(hb, 0).astype(f32)
        else:
            h = jnp.maximum(pre + b1[c], 0.0)
            h = h.astype(jnp.bfloat16).astype(f32)
        w2b = w2[c].astype(jnp.bfloat16).astype(f32)
        cols.append(h @ w2b + b2[c])
    return jnp.stack(cols, axis=1)


if __name__ == "__main__":
    N, latent_dim, nr_classes = 1024, 32, 4

    key = jax.random.PRNGKey(0)
    k_x, k_p, k_r = jax.random.split(key, 3)
    node_embedding = jax.random.normal(k_x, (N, latent_dim), jnp.float32)
    w1, b1, w2, b2 = _init_params(k_p, latent_dim, nr_classes)

    bf16_h = _default_bf16_h()
    out = node_classifier_head(node_embedding, w1, b1, w2, b2)
    out = jax.block_until_ready(out)
    assert out.shape == (N, nr_classes)

    # Tight check against a reference that applies the same bf16 rounding the kernel does.
    ref_emul = _reference_kernel_precision(node_embedding, w1, b1, w2, b2, bf16_h=bf16_h)
    # Loose check against the exact-f32 semantics of the PyTorch module.
    ref_f32 = _reference(node_embedding, w1, b1, w2, b2)
    assert jnp.allclose(out, ref_emul, atol=2e-2, rtol=2e-2)
    assert jnp.allclose(out, ref_f32, atol=5e-2, rtol=5e-2)

    # Ragged N (not a multiple of 128 / tile): handled by partial blocks, no jnp.pad.
    N2 = 777
    x2 = jax.random.normal(k_r, (N2, latent_dim), jnp.float32)
    out2 = jax.block_until_ready(node_classifier_head(x2, w1, b1, w2, b2))
    assert out2.shape == (N2, nr_classes)
    assert jnp.allclose(out2, _reference(x2, w1, b1, w2, b2), atol=5e-2, rtol=5e-2)

    print("KERNEL_OK")
</pallas_src>

<mosaic_0001>
module attributes {stable_mosaic.version = 11 : i64} {
  func.func @_node_head_kernel(%arg0: i32, %arg1: memref<1024x32xf32, #tpu.memory_space<vmem>>, %arg2: memref<32x128xbf16, #tpu.memory_space<vmem>>, %arg3: memref<1x128xf32, #tpu.memory_space<vmem>>, %arg4: memref<4x128xbf16, #tpu.memory_space<vmem>>, %arg5: memref<4x1xf32, #tpu.memory_space<vmem>>, %arg6: memref<4x1024xf32, #tpu.memory_space<vmem>>) attributes {dimension_semantics = [#tpu.dimension_semantics<parallel>], iteration_bounds = array<i64: 1>, scalar_prefetch = 0 : i64, scratch_operands = 0 : i64, tpu.core_type = #tpu.core_type<tc>, window_params = [{transform_indices = @transform_0, window_bounds = array<i64: 1024, 32>}, {pipeline_mode = #tpu.pipeline_mode<synchronous>, transform_indices = @transform_1, window_bounds = array<i64: 32, 128>}, {pipeline_mode = #tpu.pipeline_mode<synchronous>, transform_indices = @transform_2, window_bounds = array<i64: 1, 128>}, {pipeline_mode = #tpu.pipeline_mode<synchronous>, transform_indices = @transform_3, window_bounds = array<i64: 4, 128>}, {pipeline_mode = #tpu.pipeline_mode<synchronous>, transform_indices = @transform_4, window_bounds = array<i64: 4, 1>}, {transform_indices = @transform_5, window_bounds = array<i64: 4, 1024>}]} {
    %c0 = arith.constant 0 : index
    %c0_0 = arith.constant 0 : index
    %0 = vector.load %arg1[%c0, %c0_0] : memref<1024x32xf32, #tpu.memory_space<vmem>>, vector<1024x32xf32>
    %1 = arith.truncf %0 : vector<1024x32xf32> to vector<1024x32xbf16>
    %c0_1 = arith.constant 0 : index
    %c0_2 = arith.constant 0 : index
    %2 = vector.load %arg2[%c0_1, %c0_2] : memref<32x128xbf16, #tpu.memory_space<vmem>>, vector<32x128xbf16>
    %cst = arith.constant dense<0.000000e+00> : vector<1024x128xf32>
    %3 = tpu.matmul %1, %2, %cst {dimension_numbers = #tpu.dot_dimension_numbers<[1], [0], [0], [1], [0, 0, 1, 1], [], []>} : vector<1024x32xbf16>, vector<32x128xbf16>, vector<1024x128xf32> -> vector<1024x128xf32>
    %c0_3 = arith.constant 0 : index
    %c0_4 = arith.constant 0 : index
    %4 = vector.load %arg3[%c0_3, %c0_4] : memref<1x128xf32, #tpu.memory_space<vmem>>, vector<1x128xf32>
    %5 = vector.broadcast %4 : vector<1x128xf32> to vector<1024x128xf32>
    %6 = arith.addf %3, %5 : vector<1024x128xf32>
    %cst_5 = arith.constant 0.000000e+00 : f32
    %7 = vector.broadcast %cst_5 : f32 to vector<1024x128xf32>
    %8 = arith.maximumf %6, %7 : vector<1024x128xf32>
    %9 = arith.truncf %8 : vector<1024x128xf32> to vector<1024x128xbf16>
    %c0_6 = arith.constant 0 : index
    %c0_7 = arith.constant 0 : index
    %10 = vector.load %arg4[%c0_6, %c0_7] : memref<4x128xbf16, #tpu.memory_space<vmem>>, vector<4x128xbf16>
    "tpu.trace_start"() <{level = 10 : i32, message = "ck,nk->cn"}> : () -> ()
    %cst_8 = arith.constant dense<0.000000e+00> : vector<4x1024xf32>
    %11 = tpu.matmul %10, %9, %cst_8 {dimension_numbers = #tpu.dot_dimension_numbers<[1], [1], [0], [0], [0, 0, 1, 0], [], []>} : vector<4x128xbf16>, vector<1024x128xbf16>, vector<4x1024xf32> -> vector<4x1024xf32>
    "tpu.trace_stop"() : () -> ()
    %c0_9 = arith.constant 0 : index
    %c0_10 = arith.constant 0 : index
    %12 = vector.load %arg5[%c0_9, %c0_10] : memref<4x1xf32, #tpu.memory_space<vmem>>, vector<4x1xf32>
    %13 = vector.broadcast %12 : vector<4x1xf32> to vector<4x1024xf32>
    %14 = arith.addf %11, %13 : vector<4x1024xf32>
    %c0_11 = arith.constant 0 : index
    %c0_12 = arith.constant 0 : index
    %15 = vector.load %arg6[%c0_11, %c0_12] : memref<4x1024xf32, #tpu.memory_space<vmem>>, vector<4x1024xf32>
    tpu.vector_store %arg6[%c0_11, %c0_12], %14 {strides = array<i32>} : memref<4x1024xf32, #tpu.memory_space<vmem>>, vector<4x1024xf32>,
    return
  }
  func.func @transform_0(%arg0: i32) -> (i32, i32) {
    %c0_i32 = arith.constant 0 : i32
    %c0_i32_0 = arith.constant 0 : i32
    return %arg0, %c0_i32 : i32, i32
  }
  func.func @transform_1(%arg0: i32) -> (i32, i32) {
    %c0_i32 = arith.constant 0 : i32
    %c0_i32_0 = arith.constant 0 : i32
    %c0_i32_1 = arith.constant 0 : i32
    return %c0_i32, %c0_i32_0 : i32, i32
  }
  func.func @transform_2(%arg0: i32) -> (i32, i32) {
    %c0_i32 = arith.constant 0 : i32
    %c0_i32_0 = arith.constant 0 : i32
    %c0_i32_1 = arith.constant 0 : i32
    return %c0_i32, %c0_i32_0 : i32, i32
  }
  func.func @transform_3(%arg0: i32) -> (i32, i32) {
    %c0_i32 = arith.constant 0 : i32
    %c0_i32_0 = arith.constant 0 : i32
    %c0_i32_1 = arith.constant 0 : i32
    return %c0_i32, %c0_i32_0 : i32, i32
  }
  func.func @transform_4(%arg0: i32) -> (i32, i32) {
    %c0_i32 = arith.constant 0 : i32
    %c0_i32_0 = arith.constant 0 : i32
    %c0_i32_1 = arith.constant 0 : i32
    return %c0_i32, %c0_i32_0 : i32, i32
  }
  func.func @transform_5(%arg0: i32) -> (i32, i32) {
    %c0_i32 = arith.constant 0 : i32
    %c0_i32_0 = arith.constant 0 : i32
    return %c0_i32, %arg0 : i32, i32
  }
}

</mosaic_0001>

<llo_original>
// kernel: _node_classifier_head_impl.1
$region0: #{_node_classifier_head_impl.1}
  #allocation0 [shape = 'u32[]', space=smem, size = 0x4, offset = 0x4, fixed_abs, tag = 'smem constant byte address 0x4 - core index']
  #allocation1 [shape = 'u32[144,128]{1,0:T(1,128)}', space=vmem, size = 0x12000, scoped, tag = 'internal scratch']
  %s0 = inlined_call_operand.vmem [shape: f32[1024,32], index: 0, kind: input, shape index: {}]
  %s1 = inlined_call_operand.vmem [shape: bf16[32,128], index: 1, kind: input, shape index: {}]
  %s2 = inlined_call_operand.vmem [shape: f32[1,128], index: 2, kind: input, shape index: {}]
  %s3 = inlined_call_operand.vmem [shape: bf16[4,128], index: 3, kind: input, shape index: {}]
  %s4 = inlined_call_operand.vmem [shape: f32[4,1], index: 4, kind: input, shape index: {}]
  %s5 = inlined_call_operand.hbm [shape: f32[4,1024], index: 5, kind: output, shape index: {}]
  %s6 = sld [smem:[#allocation0]]
  $region30: #{_node_classifier_head_impl.1} parent=0
    _
  %s8 = ssub.s32 1, %s6
  %s9 = scalar_select 0, %s8, %s6
  $region1: #{_node_classifier_head_impl.1} parent=0
    #allocation2 [shape = 'u8[16384]{0}', space=vmem, size = 0x4000, scoped, tag = 'output window, operand 0, single buffered']
    #allocation3 [shape = 's32[1]{0}', space=sflag, size = 0x4, scoped, tag = 'scoped memory for _node_classifier_head_impl.1']
    %10 = vsyncpa [#allocation3], 0
    // Predicated region
    $region2: #{_node_classifier_head_impl.1} parent=1 // pred_check
      _
    $region3: #{_node_classifier_head_impl.1} parent=1 // pred_check_branch
      %12 = sbr.rel (0) target = $region5
    $region4: #{_node_classifier_head_impl.1} parent=1 // pred_region
      _
    $region5: #{_node_classifier_head_impl.1} parent=1 // pred_fallthru
      _
    // Predicated region
    $region6: #{_node_classifier_head_impl.1} parent=1 // pred_check
      _
    $region7: #{_node_classifier_head_impl.1} parent=1 // pred_check_branch
      %14 = sbr.rel (0) target = $region9
    $region8: #{_node_classifier_head_impl.1} parent=1 // pred_region
      _
    $region9: #{_node_classifier_head_impl.1} parent=1 // pred_fallthru
      _
    // Predicated region
    $region10: #{_node_classifier_head_impl.1} parent=1 // pred_check
      _
    $region11: #{_node_classifier_head_impl.1} parent=1 // pred_check_branch
      %16 = sbr.rel (0) target = $region13
    $region12: #{_node_classifier_head_impl.1} parent=1 // pred_region
      _
    $region13: #{_node_classifier_head_impl.1} parent=1 // pred_fallthru
      _
    // Predicated region
    $region14: #{_node_classifier_head_impl.1} parent=1 // pred_check
      _
    $region15: #{_node_classifier_head_impl.1} parent=1 // pred_check_branch
      %18 = sbr.rel (0) target = $region17
    $region16: #{_node_classifier_head_impl.1} parent=1 // pred_region
      _
    $region17: #{_node_classifier_head_impl.1} parent=1 // pred_fallthru
      _
    // Predicated region
    $region18: #{_node_classifier_head_impl.1} parent=1 // pred_check
      _
    $region19: #{_node_classifier_head_impl.1} parent=1 // pred_check_branch
      %20 = sbr.rel (0) target = $region21
    $region20: #{_node_classifier_head_impl.1} parent=1 // pred_region
      _
    $region21: #{_node_classifier_head_impl.1} parent=1 // pred_fallthru
      _
    %v22 = vld [vmem:[%s0] sm:$0xff]
    %v23 = vld [vmem:[%s0 + $0x8] sm:$0xff]
    %v24 = vld [vmem:[%s0 + $0x10] sm:$0xff]
    %v25 = vld [vmem:[%s0 + $0x18] sm:$0xff]
    %v26 = vld [vmem:[%s0 + $0x20] sm:$0xff]
    %v27 = vld [vmem:[%s0 + $0x28] sm:$0xff]
    %v28 = vld [vmem:[%s0 + $0x30] sm:$0xff]
    %v29 = vld [vmem:[%s0 + $0x38] sm:$0xff]
    %v30 = vld [vmem:[%s0 + $0x40] sm:$0xff]
    %v31 = vld [vmem:[%s0 + $0x48] sm:$0xff]
    %v32 = vld [vmem:[%s0 + $0x50] sm:$0xff]
    %v33 = vld [vmem:[%s0 + $0x58] sm:$0xff]
    %v34 = vld [vmem:[%s0 + $0x60] sm:$0xff]
    %v35 = vld [vmem:[%s0 + $0x68] sm:$0xff]
    %v36 = vld [vmem:[%s0 + $0x70] sm:$0xff]
    %v37 = vld [vmem:[%s0 + $0x78] sm:$0xff]
    %v38 = vld [vmem:[%s0 + $0x80] sm:$0xff]
    %v39 = vld [vmem:[%s0 + $0x88] sm:$0xff]
    %v40 = vld [vmem:[%s0 + $0x90] sm:$0xff]
    %v41 = vld [vmem:[%s0 + $0x98] sm:$0xff]
    %v42 = vld [vmem:[%s0 + $0xa0] sm:$0xff]
    %v43 = vld [vmem:[%s0 + $0xa8] sm:$0xff]
    %v44 = vld [vmem:[%s0 + $0xb0] sm:$0xff]
    %v45 = vld [vmem:[%s0 + $0xb8] sm:$0xff]
    %v46 = vld [vmem:[%s0 + $0xc0] sm:$0xff]
    %v47 = vld [vmem:[%s0 + $0xc8] sm:$0xff]
    %v48 = vld [vmem:[%s0 + $0xd0] sm:$0xff]
    %v49 = vld [vmem:[%s0 + $0xd8] sm:$0xff]
    %v50 = vld [vmem:[%s0 + $0xe0] sm:$0xff]
    %v51 = vld [vmem:[%s0 + $0xe8] sm:$0xff]
    %v52 = vld [vmem:[%s0 + $0xf0] sm:$0xff]
    %v53 = vld [vmem:[%s0 + $0xf8] sm:$0xff]
    %v54 = vld [vmem:[%s0 + $0x100] sm:$0xff]
    %v55 = vld [vmem:[%s0 + $0x108] sm:$0xff]
    %v56 = vld [vmem:[%s0 + $0x110] sm:$0xff]
    %v57 = vld [vmem:[%s0 + $0x118] sm:$0xff]
    %v58 = vld [vmem:[%s0 + $0x120] sm:$0xff]
    %v59 = vld [vmem:[%s0 + $0x128] sm:$0xff]
    %v60 = vld [vmem:[%s0 + $0x130] sm:$0xff]
    %v61 = vld [vmem:[%s0 + $0x138] sm:$0xff]
    %v62 = vld [vmem:[%s0 + $0x140] sm:$0xff]
    %v63 = vld [vmem:[%s0 + $0x148] sm:$0xff]
    %v64 = vld [vmem:[%s0 + $0x150] sm:$0xff]
    %v65 = vld [vmem:[%s0 + $0x158] sm:$0xff]
    %v66 = vld [vmem:[%s0 + $0x160] sm:$0xff]
    %v67 = vld [vmem:[%s0 + $0x168] sm:$0xff]
    %v68 = vld [vmem:[%s0 + $0x170] sm:$0xff]
    %v69 = vld [vmem:[%s0 + $0x178] sm:$0xff]
    %v70 = vld [vmem:[%s0 + $0x180] sm:$0xff]
    %v71 = vld [vmem:[%s0 + $0x188] sm:$0xff]
    %v72 = vld [vmem:[%s0 + $0x190] sm:$0xff]
    %v73 = vld [vmem:[%s0 + $0x198] sm:$0xff]
    %v74 = vld [vmem:[%s0 + $0x1a0] sm:$0xff]
    %v75 = vld [vmem:[%s0 + $0x1a8] sm:$0xff]
    %v76 = vld [vmem:[%s0 + $0x1b0] sm:$0xff]
    %v77 = vld [vmem:[%s0 + $0x1b8] sm:$0xff]
    %v78 = vld [vmem:[%s0 + $0x1c0] sm:$0xff]
    %v79 = vld [vmem:[%s0 + $0x1c8] sm:$0xff]
    %v80 = vld [vmem:[%s0 + $0x1d0] sm:$0xff]
    %v81 = vld [vmem:[%s0 + $0x1d8] sm:$0xff]
    %v82 = vld [vmem:[%s0 + $0x1e0] sm:$0xff]
    %v83 = vld [vmem:[%s0 + $0x1e8] sm:$0xff]
    %v84 = vld [vmem:[%s0 + $0x1f0] sm:$0xff]
    %v85 = vld [vmem:[%s0 + $0x1f8] sm:$0xff]
    %v86 = vld [vmem:[%s0 + $0x200] sm:$0xff]
    %v87 = vld [vmem:[%s0 + $0x208] sm:$0xff]
    %v88 = vld [vmem:[%s0 + $0x210] sm:$0xff]
    %v89 = vld [vmem:[%s0 + $0x218] sm:$0xff]
    %v90 = vld [vmem:[%s0 + $0x220] sm:$0xff]
    %v91 = vld [vmem:[%s0 + $0x228] sm:$0xff]
    %v92 = vld [vmem:[%s0 + $0x230] sm:$0xff]
    %v93 = vld [vmem:[%s0 + $0x238] sm:$0xff]
    %v94 = vld [vmem:[%s0 + $0x240] sm:$0xff]
    %v95 = vld [vmem:[%s0 + $0x248] sm:$0xff]
    %v96 = vld [vmem:[%s0 + $0x250] sm:$0xff]
    %v97 = vld [vmem:[%s0 + $0x258] sm:$0xff]
    %v98 = vld [vmem:[%s0 + $0x260] sm:$0xff]
    %v99 = vld [vmem:[%s0 + $0x268] sm:$0xff]
    %v100 = vld [vmem:[%s0 + $0x270] sm:$0xff]
    %v101 = vld [vmem:[%s0 + $0x278] sm:$0xff]
    %v102 = vld [vmem:[%s0 + $0x280] sm:$0xff]
    %v103 = vld [vmem:[%s0 + $0x288] sm:$0xff]
    %v104 = vld [vmem:[%s0 + $0x290] sm:$0xff]
    %v105 = vld [vmem:[%s0 + $0x298] sm:$0xff]
    %v106 = vld [vmem:[%s0 + $0x2a0] sm:$0xff]
    %v107 = vld [vmem:[%s0 + $0x2a8] sm:$0xff]
    %v108 = vld [vmem:[%s0 + $0x2b0] sm:$0xff]
    %v109 = vld [vmem:[%s0 + $0x2b8] sm:$0xff]
    %v110 = vld [vmem:[%s0 + $0x2c0] sm:$0xff]
    %v111 = vld [vmem:[%s0 + $0x2c8] sm:$0xff]
    %v112 = vld [vmem:[%s0 + $0x2d0] sm:$0xff]
    %v113 = vld [vmem:[%s0 + $0x2d8] sm:$0xff]
    %v114 = vld [vmem:[%s0 + $0x2e0] sm:$0xff]
    %v115 = vld [vmem:[%s0 + $0x2e8] sm:$0xff]
    %v116 = vld [vmem:[%s0 + $0x2f0] sm:$0xff]
    %v117 = vld [vmem:[%s0 + $0x2f8] sm:$0xff]
    %v118 = vld [vmem:[%s0 + $0x300] sm:$0xff]
    %v119 = vld [vmem:[%s0 + $0x308] sm:$0xff]
    %v120 = vld [vmem:[%s0 + $0x310] sm:$0xff]
    %v121 = vld [vmem:[%s0 + $0x318] sm:$0xff]
    %v122 = vld [vmem:[%s0 + $0x320] sm:$0xff]
    %v123 = vld [vmem:[%s0 + $0x328] sm:$0xff]
    %v124 = vld [vmem:[%s0 + $0x330] sm:$0xff]
    %v125 = vld [vmem:[%s0 + $0x338] sm:$0xff]
    %v126 = vld [vmem:[%s0 + $0x340] sm:$0xff]
    %v127 = vld [vmem:[%s0 + $0x348] sm:$0xff]
    %v128 = vld [vmem:[%s0 + $0x350] sm:$0xff]
    %v129 = vld [vmem:[%s0 + $0x358] sm:$0xff]
    %v130 = vld [vmem:[%s0 + $0x360] sm:$0xff]
    %v131 = vld [vmem:[%s0 + $0x368] sm:$0xff]
    %v132 = vld [vmem:[%s0 + $0x370] sm:$0xff]
    %v133 = vld [vmem:[%s0 + $0x378] sm:$0xff]
    %v134 = vld [vmem:[%s0 + $0x380] sm:$0xff]
    %v135 = vld [vmem:[%s0 + $0x388] sm:$0xff]
    %v136 = vld [vmem:[%s0 + $0x390] sm:$0xff]
    %v137 = vld [vmem:[%s0 + $0x398] sm:$0xff]
    %v138 = vld [vmem:[%s0 + $0x3a0] sm:$0xff]
    %v139 = vld [vmem:[%s0 + $0x3a8] sm:$0xff]
    %v140 = vld [vmem:[%s0 + $0x3b0] sm:$0xff]
    %v141 = vld [vmem:[%s0 + $0x3b8] sm:$0xff]
    %v142 = vld [vmem:[%s0 + $0x3c0] sm:$0xff]
    %v143 = vld [vmem:[%s0 + $0x3c8] sm:$0xff]
    %v144 = vld [vmem:[%s0 + $0x3d0] sm:$0xff]
    %v145 = vld [vmem:[%s0 + $0x3d8] sm:$0xff]
    %v146 = vld [vmem:[%s0 + $0x3e0] sm:$0xff]
    %v147 = vld [vmem:[%s0 + $0x3e8] sm:$0xff]
    %v148 = vld [vmem:[%s0 + $0x3f0] sm:$0xff]
    %v149 = vld [vmem:[%s0 + $0x3f8] sm:$0xff]
    %v150 = vpack.c.bf16 %v23, %v22
    %v151 = vpack.c.bf16 %v25, %v24
    %v152 = vpack.c.bf16 %v27, %v26
    %v153 = vpack.c.bf16 %v29, %v28
    %v154 = vpack.c.bf16 %v31, %v30
    %v155 = vpack.c.bf16 %v33, %v32
    %v156 = vpack.c.bf16 %v35, %v34
    %v157 = vpack.c.bf16 %v37, %v36
    %v158 = vpack.c.bf16 %v39, %v38
    %v159 = vpack.c.bf16 %v41, %v40
    %v160 = vpack.c.bf16 %v43, %v42
    %v161 = vpack.c.bf16 %v45, %v44
    %v162 = vpack.c.bf16 %v47, %v46
    %v163 = vpack.c.bf16 %v49, %v48
    %v164 = vpack.c.bf16 %v51, %v50
    %v165 = vpack.c.bf16 %v53, %v52
    %v166 = vpack.c.bf16 %v55, %v54
    %v167 = vpack.c.bf16 %v57, %v56
    %v168 = vpack.c.bf16 %v59, %v58
    %v169 = vpack.c.bf16 %v61, %v60
    %v170 = vpack.c.bf16 %v63, %v62
    %v171 = vpack.c.bf16 %v65, %v64
    %v172 = vpack.c.bf16 %v67, %v66
    %v173 = vpack.c.bf16 %v69, %v68
    %v174 = vpack.c.bf16 %v71, %v70
    %v175 = vpack.c.bf16 %v73, %v72
    %v176 = vpack.c.bf16 %v75, %v74
    %v177 = vpack.c.bf16 %v77, %v76
    %v178 = vpack.c.bf16 %v79, %v78
    %v179 = vpack.c.bf16 %v81, %v80
    %v180 = vpack.c.bf16 %v83, %v82
    %v181 = vpack.c.bf16 %v85, %v84
    %v182 = vpack.c.bf16 %v87, %v86
    %v183 = vpack.c.bf16 %v89, %v88
    %v184 = vpack.c.bf16 %v91, %v90
    %v185 = vpack.c.bf16 %v93, %v92
    %v186 = vpack.c.bf16 %v95, %v94
    %v187 = vpack.c.bf16 %v97, %v96
    %v188 = vpack.c.bf16 %v99, %v98
    %v189 = vpack.c.bf16 %v101, %v100
    %v190 = vpack.c.bf16 %v103, %v102
    %v191 = vpack.c.bf16 %v105, %v104
    %v192 = vpack.c.bf16 %v107, %v106
    %v193 = vpack.c.bf16 %v109, %v108
    %v194 = vpack.c.bf16 %v111, %v110
    %v195 = vpack.c.bf16 %v113, %v112
    %v196 = vpack.c.bf16 %v115, %v114
    %v197 = vpack.c.bf16 %v117, %v116
    %v198 = vpack.c.bf16 %v119, %v118
    %v199 = vpack.c.bf16 %v121, %v120
    %v200 = vpack.c.bf16 %v123, %v122
    %v201 = vpack.c.bf16 %v125, %v124
    %v202 = vpack.c.bf16 %v127, %v126
    %v203 = vpack.c.bf16 %v129, %v128
    %v204 = vpack.c.bf16 %v131, %v130
    %v205 = vpack.c.bf16 %v133, %v132
    %v206 = vpack.c.bf16 %v135, %v134
    %v207 = vpack.c.bf16 %v137, %v136
    %v208 = vpack.c.bf16 %v139, %v138
    %v209 = vpack.c.bf16 %v141, %v140
    %v210 = vpack.c.bf16 %v143, %v142
    %v211 = vpack.c.bf16 %v145, %v144
    %v212 = vpack.c.bf16 %v147, %v146
    %v213 = vpack.c.bf16 %v149, %v148
    %v214 = vld [vmem:[%s1] sm:$0xf]
    %v215 = vld [vmem:[%s1 + $0x4] sm:$0xf]
    %v216 = vld [vmem:[%s1 + $0x8] sm:$0xf]
    %v217 = vld [vmem:[%s1 + $0xc] sm:$0xf]
    %v218 = vld [vmem:[%s2] sm:$0x1]
    %v220 = vlaneseq
    %v221 = vshrl.u32 %v220, 7
    %v222 = vsub.s32 0, %v221
    %v223 = vrot.slane %v218, %v222
    %v229 = vunpack.c.l.b16 %v214
    %v230 = vunpack.c.l.b16 %v215
    %v231 = vunpack.c.l.b16 %v216
    %v232 = vunpack.c.l.b16 %v217
    %v233 = vpack.c.b16 %v230, %v229
    %v234 = vpack.c.b16 %v232, %v231
    %vm237 = vcmask 261120
    %v239 = vsel %vm237, %v150, 0
    %v242 = vsel %vm237, %v151, 0
    %v245 = vsel %vm237, %v152, 0
    %v248 = vsel %vm237, %v153, 0
    %v251 = vsel %vm237, %v154, 0
    %v254 = vsel %vm237, %v155, 0
    %v257 = vsel %vm237, %v156, 0
    %v260 = vsel %vm237, %v157, 0
    %v263 = vsel %vm237, %v158, 0
    %v266 = vsel %vm237, %v159, 0
    %v269 = vsel %vm237, %v160, 0
    %v272 = vsel %vm237, %v161, 0
    %v275 = vsel %vm237, %v162, 0
    %v278 = vsel %vm237, %v163, 0
    %v281 = vsel %vm237, %v164, 0
    %v284 = vsel %vm237, %v165, 0
    %v287 = vsel %vm237, %v166, 0
    %v290 = vsel %vm237, %v167, 0
    %v293 = vsel %vm237, %v168, 0
    %v296 = vsel %vm237, %v169, 0
    %v299 = vsel %vm237, %v170, 0
    %v302 = vsel %vm237, %v171, 0
    %v305 = vsel %vm237, %v172, 0
    %v308 = vsel %vm237, %v173, 0
    %v311 = vsel %vm237, %v174, 0
    %v314 = vsel %vm237, %v175, 0
    %v317 = vsel %vm237, %v176, 0
    %v320 = vsel %vm237, %v177, 0
    %v323 = vsel %vm237, %v178, 0
    %v326 = vsel %vm237, %v179, 0
    %v329 = vsel %vm237, %v180, 0
    %v332 = vsel %vm237, %v181, 0
    %v335 = vsel %vm237, %v182, 0
    %v338 = vsel %vm237, %v183, 0
    %v341 = vsel %vm237, %v184, 0
    %v344 = vsel %vm237, %v185, 0
    %v347 = vsel %vm237, %v186, 0
    %v350 = vsel %vm237, %v187, 0
    %v353 = vsel %vm237, %v188, 0
    %v356 = vsel %vm237, %v189, 0
    %v359 = vsel %vm237, %v190, 0
    %v362 = vsel %vm237, %v191, 0
    %v365 = vsel %vm237, %v192, 0
    %v368 = vsel %vm237, %v193, 0
    %v371 = vsel %vm237, %v194, 0
    %v374 = vsel %vm237, %v195, 0
    %v377 = vsel %vm237, %v196, 0
    %v380 = vsel %vm237, %v197, 0
    %v383 = vsel %vm237, %v198, 0
    %v386 = vsel %vm237, %v199, 0
    %v389 = vsel %vm237, %v200, 0
    %v392 = vsel %vm237, %v201, 0
    %v395 = vsel %vm237, %v202, 0
    %v398 = vsel %vm237, %v203, 0
    %v401 = vsel %vm237, %v204, 0
    %v404 = vsel %vm237, %v205, 0
    %v407 = vsel %vm237, %v206, 0
    %v410 = vsel %vm237, %v207, 0
    %v413 = vsel %vm237, %v208, 0
    %v416 = vsel %vm237, %v209, 0
    %v419 = vsel %vm237, %v210, 0
    %v422 = vsel %vm237, %v211, 0
    %v425 = vsel %vm237, %v212, 0
    %v428 = vsel %vm237, %v213, 0
    %430 = vmatprep.subr.bf16.mxu0 0
    %431 = vmatpush1.bf16.msra.mxu0 %v233
    %432 = vmatprep.subr.bf16.mxu0 0
    %433 = vmatpush1.bf16.msra.mxu0 %v234
    %434 = vmatprep.subr.bf16.mxu0 0
    %435 = vmatpush1.bf16.msra.mxu0 0
    %436 = vmatprep.subr.bf16.mxu0 0
    %437 = vmatpush1.bf16.msra.mxu0 0
    %438 = vmatprep.subr.bf16.mxu0 0
    %439 = vmatpush1.bf16.msra.mxu0 0
    %440 = vmatprep.subr.bf16.mxu0 0
    %441 = vmatpush1.bf16.msra.mxu0 0
    %442 = vmatprep.subr.bf16.mxu0 0
    %443 = vmatpush1.bf16.msra.mxu0 0
    %444 = vmatprep.subr.bf16.mxu0 0
    %445 = vmatpush1.bf16.msra.mxu0 0
    %446 = vmatprep.subr.bf16.mxu0 0
    %447 = vmatpush1.bf16.msra.mxu0 0
    %448 = vmatprep.subr.bf16.mxu0 0
    %449 = vmatpush1.bf16.msra.mxu0 0
    %450 = vmatprep.subr.bf16.mxu0 0
    %451 = vmatpush1.bf16.msra.mxu0 0
    %452 = vmatprep.subr.bf16.mxu0 0
    %453 = vmatpush1.bf16.msra.mxu0 0
    %454 = vmatprep.subr.bf16.mxu0 0
    %455 = vmatpush1.bf16.msra.mxu0 0
    %456 = vmatprep.subr.bf16.mxu0 0
    %457 = vmatpush1.bf16.msra.mxu0 0
    %458 = vmatprep.subr.bf16.mxu0 0
    %459 = vmatpush1.bf16.msra.mxu0 0
    %460 = vmatprep.subr.bf16.mxu0 0
    %461 = vmatpush1.bf16.msra.mxu0 0
    %462 = vmatprep.mubr.bf16.mxu0 0
    %463 = vmatmul.mubr.bf16.gmra.mrb[0].mxu0 %v239
    %v464 = vpop.f32.mrb[0].mxu0
    %v465 = vadd.f32 %v223, %v464
    %v466 = vpop.f32.mrb[0].mxu0
    %v467 = vpop.f32.mrb[0].mxu0
    %v468 = vadd.f32 %v223, %v467
    %v469 = vpop.f32.mrb[0].mxu0
    %470 = vmatprep.mubr.bf16.mxu0 0
    %471 = vmatmul.mubr.bf16.gmra.mrb[0].mxu0 %v242
    %v472 = vpop.f32.mrb[0].mxu0
    %v473 = vadd.f32 %v223, %v472
    %v474 = vpop.f32.mrb[0].mxu0
    %v475 = vpop.f32.mrb[0].mxu0
    %v476 = vadd.f32 %v223, %v475
    %v477 = vpop.f32.mrb[0].mxu0
    %478 = vmatprep.mubr.bf16.mxu0 0
    %479 = vmatmul.mubr.bf16.gmra.mrb[0].mxu0 %v245
    %v480 = vpop.f32.mrb[0].mxu0
    %v481 = vadd.f32 %v223, %v480
    %v482 = vpop.f32.mrb[0].mxu0
    %v483 = vpop.f32.mrb[0].mxu0
    %v484 = vadd.f32 %v223, %v483
    %v485 = vpop.f32.mrb[0].mxu0
    %486 = vmatprep.mubr.bf16.mxu0 0
    %487 = vmatmul.mubr.bf16.gmra.mrb[0].mxu0 %v248
    %v488 = vpop.f32.mrb[0].mxu0
    %v489 = vadd.f32 %v223, %v488
    %v490 = vpop.f32.mrb[0].mxu0
    %v491 = vpop.f32.mrb[0].mxu0
    %v492 = vadd.f32 %v223, %v491
    %v493 = vpop.f32.mrb[0].mxu0
    %494 = vmatprep.mubr.bf16.mxu0 0
    %495 = vmatmul.mubr.bf16.gmra.mrb[0].mxu0 %v251
    %v496 = vpop.f32.mrb[0].mxu0
    %v497 = vadd.f32 %v223, %v496
    %v498 = vpop.f32.mrb[0].mxu0
    %v499 = vpop.f32.mrb[0].mxu0
    %v500 = vadd.f32 %v223, %v499
    %v501 = vpop.f32.mrb[0].mxu0
    %502 = vmatprep.mubr.bf16.mxu0 0
    %503 = vmatmul.mubr.bf16.gmra.mrb[0].mxu0 %v254
    %v504 = vpop.f32.mrb[0].mxu0
    %v505 = vadd.f32 %v223, %v504
    %v506 = vpop.f32.mrb[0].mxu0
    %v507 = vpop.f32.mrb[0].mxu0
    %v508 = vadd.f32 %v223, %v507
    %v509 = vpop.f32.mrb[0].mxu0
    %510 = vmatprep.mubr.bf16.mxu0 0
    %511 = vmatmul.mubr.bf16.gmra.mrb[0].mxu0 %v257
    %v512 = vpop.f32.mrb[0].mxu0
    %v513 = vadd.f32 %v223, %v512
    %v514 = vpop.f32.mrb[0].mxu0
    %v515 = vpop.f32.mrb[0].mxu0
    %v516 = vadd.f32 %v223, %v515
    %v517 = vpop.f32.mrb[0].mxu0
    %518 = vmatprep.mubr.bf16.mxu0 0
    %519 = vmatmul.mubr.bf16.gmra.mrb[0].mxu0 %v260
    %v520 = vpop.f32.mrb[0].mxu0
    %v521 = vadd.f32 %v223, %v520
    %v522 = vpop.f32.mrb[0].mxu0
    %v523 = vpop.f32.mrb[0].mxu0
    %v524 = vadd.f32 %v223, %v523
    %v525 = vpop.f32.mrb[0].mxu0
    %526 = vmatprep.mubr.bf16.mxu0 0
    %527 = vmatmul.mubr.bf16.gmra.mrb[0].mxu0 %v263
    %v528 = vpop.f32.mrb[0].mxu0
    %v529 = vadd.f32 %v223, %v528
    %v530 = vpop.f32.mrb[0].mxu0
    %v531 = vpop.f32.mrb[0].mxu0
    %v532 = vadd.f32 %v223, %v531
    %v533 = vpop.f32.mrb[0].mxu0
    %534 = vmatprep.mubr.bf16.mxu0 0
    %535 = vmatmul.mubr.bf16.gmra.mrb[0].mxu0 %v266
    %v536 = vpop.f32.mrb[0].mxu0
    %v537 = vadd.f32 %v223, %v536
    %v538 = vpop.f32.mrb[0].mxu0
    %v539 = vpop.f32.mrb[0].mxu0
    %v540 = vadd.f32 %v223, %v539
    %v541 = vpop.f32.mrb[0].mxu0
    %542 = vmatprep.mubr.bf16.mxu0 0
    %543 = vmatmul.mubr.bf16.gmra.mrb[0].mxu0 %v269
    %v544 = vpop.f32.mrb[0].mxu0
    %v545 = vadd.f32 %v223, %v544
    %v546 = vpop.f32.mrb[0].mxu0
    %v547 = vpop.f32.mrb[0].mxu0
    %v548 = vadd.f32 %v223, %v547
    %v549 = vpop.f32.mrb[0].mxu0
    %550 = vmatprep.mubr.bf16.mxu0 0
    %551 = vmatmul.mubr.bf16.gmra.mrb[0].mxu0 %v272
    %v552 = vpop.f32.mrb[0].mxu0
    %v553 = vadd.f32 %v223, %v552
    %v554 = vpop.f32.mrb[0].mxu0
    %v555 = vpop.f32.mrb[0].mxu0
    %v556 = vadd.f32 %v223, %v555
    %v557 = vpop.f32.mrb[0].mxu0
    %558 = vmatprep.mubr.bf16.mxu0 0
    %559 = vmatmul.mubr.bf16.gmra.mrb[0].mxu0 %v275
    %v560 = vpop.f32.mrb[0].mxu0
    %v561 = vadd.f32 %v223, %v560
    %v562 = vpop.f32.mrb[0].mxu0
    %v563 = vpop.f32.mrb[0].mxu0
    %v564 = vadd.f32 %v223, %v563
    %v565 = vpop.f32.mrb[0].mxu0
    %566 = vmatprep.mubr.bf16.mxu0 0
    %567 = vmatmul.mubr.bf16.gmra.mrb[0].mxu0 %v278
    %v568 = vpop.f32.mrb[0].mxu0
    %v569 = vadd.f32 %v223, %v568
    %v570 = vpop.f32.mrb[0].mxu0
    %v571 = vpop.f32.mrb[0].mxu0
    %v572 = vadd.f32 %v223, %v571
    %v573 = vpop.f32.mrb[0].mxu0
    %574 = vmatprep.mubr.bf16.mxu0 0
    %575 = vmatmul.mubr.bf16.gmra.mrb[0].mxu0 %v281
    %v576 = vpop.f32.mrb[0].mxu0
    %v577 = vadd.f32 %v223, %v576
    %v578 = vpop.f32.mrb[0].mxu0
    %v579 = vpop.f32.mrb[0].mxu0
    %v580 = vadd.f32 %v223, %v579
    %v581 = vpop.f32.mrb[0].mxu0
    %582 = vmatprep.mubr.bf16.mxu0 0
    %583 = vmatmul.mubr.bf16.gmra.mrb[0].mxu0 %v284
    %v584 = vpop.f32.mrb[0].mxu0
    %v585 = vadd.f32 %v223, %v584
    %v586 = vpop.f32.mrb[0].mxu0
    %v587 = vpop.f32.mrb[0].mxu0
    %v588 = vadd.f32 %v223, %v587
    %v589 = vpop.f32.mrb[0].mxu0
    %590 = vmatprep.mubr.bf16.mxu0 0
    %591 = vmatmul.mubr.bf16.gmra.mrb[0].mxu0 %v287
    %v592 = vpop.f32.mrb[0].mxu0
    %v593 = vadd.f32 %v223, %v592
    %v594 = vpop.f32.mrb[0].mxu0
    %v595 = vpop.f32.mrb[0].mxu0
    %v596 = vadd.f32 %v223, %v595
    %v597 = vpop.f32.mrb[0].mxu0
    %598 = vmatprep.mubr.bf16.mxu0 0
    %599 = vmatmul.mubr.bf16.gmra.mrb[0].mxu0 %v290
    %v600 = vpop.f32.mrb[0].mxu0
    %v601 = vadd.f32 %v223, %v600
    %v602 = vpop.f32.mrb[0].mxu0
    %v603 = vpop.f32.mrb[0].mxu0
    %v604 = vadd.f32 %v223, %v603
    %v605 = vpop.f32.mrb[0].mxu0
    %606 = vmatprep.mubr.bf16.mxu0 0
    %607 = vmatmul.mubr.bf16.gmra.mrb[0].mxu0 %v293
    %v608 = vpop.f32.mrb[0].mxu0
    %v609 = vadd.f32 %v223, %v608
    %v610 = vpop.f32.mrb[0].mxu0
    %v611 = vpop.f32.mrb[0].mxu0
    %v612 = vadd.f32 %v223, %v611
    %v613 = vpop.f32.mrb[0].mxu0
    %614 = vmatprep.mubr.bf16.mxu0 0
    %615 = vmatmul.mubr.bf16.gmra.mrb[0].mxu0 %v296
    %v616 = vpop.f32.mrb[0].mxu0
    %v617 = vadd.f32 %v223, %v616
    %v618 = vpop.f32.mrb[0].mxu0
    %v619 = vpop.f32.mrb[0].mxu0
    %v620 = vadd.f32 %v223, %v619
    %v621 = vpop.f32.mrb[0].mxu0
    %622 = vmatprep.mubr.bf16.mxu0 0
    %623 = vmatmul.mubr.bf16.gmra.mrb[0].mxu0 %v299
    %v624 = vpop.f32.mrb[0].mxu0
    %v625 = vadd.f32 %v223, %v624
    %v626 = vpop.f32.mrb[0].mxu0
    %v627 = vpop.f32.mrb[0].mxu0
    %v628 = vadd.f32 %v223, %v627
    %v629 = vpop.f32.mrb[0].mxu0
    %630 = vmatprep.mubr.bf16.mxu0 0
    %631 = vmatmul.mubr.bf16.gmra.mrb[0].mxu0 %v302
    %v632 = vpop.f32.mrb[0].mxu0
    %v633 = vadd.f32 %v223, %v632
    %v634 = vpop.f32.mrb[0].mxu0
    %v635 = vpop.f32.mrb[0].mxu0
    %v636 = vadd.f32 %v223, %v635
    %v637 = vpop.f32.mrb[0].mxu0
    %638 = vmatprep.mubr.bf16.mxu0 0
    %639 = vmatmul.mubr.bf16.gmra.mrb[0].mxu0 %v305
    %v640 = vpop.f32.mrb[0].mxu0
    %v641 = vadd.f32 %v223, %v640
    %v642 = vpop.f32.mrb[0].mxu0
    %v643 = vpop.f32.mrb[0].mxu0
    %v644 = vadd.f32 %v223, %v643
    %v645 = vpop.f32.mrb[0].mxu0
    %646 = vmatprep.mubr.bf16.mxu0 0
    %647 = vmatmul.mubr.bf16.gmra.mrb[0].mxu0 %v308
    %v648 = vpop.f32.mrb[0].mxu0
    %v649 = vadd.f32 %v223, %v648
    %v650 = vpop.f32.mrb[0].mxu0
    %v651 = vpop.f32.mrb[0].mxu0
    %v652 = vadd.f32 %v223, %v651
    %v653 = vpop.f32.mrb[0].mxu0
    %654 = vmatprep.mubr.bf16.mxu0 0
    %655 = vmatmul.mubr.bf16.gmra.mrb[0].mxu0 %v311
    %v656 = vpop.f32.mrb[0].mxu0
    %v657 = vadd.f32 %v223, %v656
    %v658 = vpop.f32.mrb[0].mxu0
    %v659 = vpop.f32.mrb[0].mxu0
    %v660 = vadd.f32 %v223, %v659
    %v661 = vpop.f32.mrb[0].mxu0
    %662 = vmatprep.mubr.bf16.mxu0 0
    %663 = vmatmul.mubr.bf16.gmra.mrb[0].mxu0 %v314
    %v664 = vpop.f32.mrb[0].mxu0
    %v665 = vadd.f32 %v223, %v664
    %v666 = vpop.f32.mrb[0].mxu0
    %v667 = vpop.f32.mrb[0].mxu0
    %v668 = vadd.f32 %v223, %v667
    %v669 = vpop.f32.mrb[0].mxu0
    %670 = vmatprep.mubr.bf16.mxu0 0
    %671 = vmatmul.mubr.bf16.gmra.mrb[0].mxu0 %v317
    %v672 = vpop.f32.mrb[0].mxu0
    %v673 = vadd.f32 %v223, %v672
    %v674 = vpop.f32.mrb[0].mxu0
    %v675 = vpop.f32.mrb[0].mxu0
    %v676 = vadd.f32 %v223, %v675
    %v677 = vpop.f32.mrb[0].mxu0
    %678 = vmatprep.mubr.bf16.mxu0 0
    %679 = vmatmul.mubr.bf16.gmra.mrb[0].mxu0 %v320
    %v680 = vpop.f32.mrb[0].mxu0
    %v681 = vadd.f32 %v223, %v680
    %v682 = vpop.f32.mrb[0].mxu0
    %v683 = vpop.f32.mrb[0].mxu0
    %v684 = vadd.f32 %v223, %v683
    %v685 = vpop.f32.mrb[0].mxu0
    %686 = vmatprep.mubr.bf16.mxu0 0
    %687 = vmatmul.mubr.bf16.gmra.mrb[0].mxu0 %v323
    %v688 = vpop.f32.mrb[0].mxu0
    %v689 = vadd.f32 %v223, %v688
    %v690 = vpop.f32.mrb[0].mxu0
    %v691 = vpop.f32.mrb[0].mxu0
    %v692 = vadd.f32 %v223, %v691
    %v693 = vpop.f32.mrb[0].mxu0
    %694 = vmatprep.mubr.bf16.mxu0 0
    %695 = vmatmul.mubr.bf16.gmra.mrb[0].mxu0 %v326
    %v696 = vpop.f32.mrb[0].mxu0
    %v697 = vadd.f32 %v223, %v696
    %v698 = vpop.f32.mrb[0].mxu0
    %v699 = vpop.f32.mrb[0].mxu0
    %v700 = vadd.f32 %v223, %v699
    %v701 = vpop.f32.mrb[0].mxu0
    %702 = vmatprep.mubr.bf16.mxu0 0
    %703 = vmatmul.mubr.bf16.gmra.mrb[0].mxu0 %v329
    %v704 = vpop.f32.mrb[0].mxu0
    %v705 = vadd.f32 %v223, %v704
    %v706 = vpop.f32.mrb[0].mxu0
    %v707 = vpop.f32.mrb[0].mxu0
    %v708 = vadd.f32 %v223, %v707
    %v709 = vpop.f32.mrb[0].mxu0
    %710 = vmatprep.mubr.bf16.mxu0 0
    %711 = vmatmul.mubr.bf16.gmra.mrb[0].mxu0 %v332
    %v712 = vpop.f32.mrb[0].mxu0
    %v713 = vadd.f32 %v223, %v712
    %v714 = vpop.f32.mrb[0].mxu0
    %v715 = vpop.f32.mrb[0].mxu0
    %v716 = vadd.f32 %v223, %v715
    %v717 = vpop.f32.mrb[0].mxu0
    %718 = vmatprep.mubr.bf16.mxu0 0
    %719 = vmatmul.mubr.bf16.gmra.mrb[0].mxu0 %v335
    %v720 = vpop.f32.mrb[0].mxu0
    %v721 = vadd.f32 %v223, %v720
    %v722 = vpop.f32.mrb[0].mxu0
    %v723 = vpop.f32.mrb[0].mxu0
    %v724 = vadd.f32 %v223, %v723
    %v725 = vpop.f32.mrb[0].mxu0
    %726 = vmatprep.mubr.bf16.mxu0 0
    %727 = vmatmul.mubr.bf16.gmra.mrb[0].mxu0 %v338
    %v728 = vpop.f32.mrb[0].mxu0
    %v729 = vadd.f32 %v223, %v728
    %v730 = vpop.f32.mrb[0].mxu0
    %v731 = vpop.f32.mrb[0].mxu0
    %v732 = vadd.f32 %v223, %v731
    %v733 = vpop.f32.mrb[0].mxu0
    %734 = vmatprep.mubr.bf16.mxu0 0
    %735 = vmatmul.mubr.bf16.gmra.mrb[0].mxu0 %v341
    %v736 = vpop.f32.mrb[0].mxu0
    %v737 = vadd.f32 %v223, %v736
    %v738 = vpop.f32.mrb[0].mxu0
    %v739 = vpop.f32.mrb[0].mxu0
    %v740 = vadd.f32 %v223, %v739
    %v741 = vpop.f32.mrb[0].mxu0
    %742 = vmatprep.mubr.bf16.mxu0 0
    %743 = vmatmul.mubr.bf16.gmra.mrb[0].mxu0 %v344
    %v744 = vpop.f32.mrb[0].mxu0
    %v745 = vadd.f32 %v223, %v744
    %v746 = vpop.f32.mrb[0].mxu0
    %v747 = vpop.f32.mrb[0].mxu0
    %v748 = vadd.f32 %v223, %v747
    %v749 = vpop.f32.mrb[0].mxu0
    %750 = vmatprep.mubr.bf16.mxu0 0
    %751 = vmatmul.mubr.bf16.gmra.mrb[0].mxu0 %v347
    %v752 = vpop.f32.mrb[0].mxu0
    %v753 = vadd.f32 %v223, %v752
    %v754 = vpop.f32.mrb[0].mxu0
    %v755 = vpop.f32.mrb[0].mxu0
    %v756 = vadd.f32 %v223, %v755
    %v757 = vpop.f32.mrb[0].mxu0
    %758 = vmatprep.mubr.bf16.mxu0 0
    %759 = vmatmul.mubr.bf16.gmra.mrb[0].mxu0 %v350
    %v760 = vpop.f32.mrb[0].mxu0
    %v761 = vadd.f32 %v223, %v760
    %v762 = vpop.f32.mrb[0].mxu0
    %v763 = vpop.f32.mrb[0].mxu0
    %v764 = vadd.f32 %v223, %v763
    %v765 = vpop.f32.mrb[0].mxu0
    %766 = vmatprep.mubr.bf16.mxu0 0
    %767 = vmatmul.mubr.bf16.gmra.mrb[0].mxu0 %v353
    %v768 = vpop.f32.mrb[0].mxu0
    %v769 = vadd.f32 %v223, %v768
    %v770 = vpop.f32.mrb[0].mxu0
    %v771 = vpop.f32.mrb[0].mxu0
    %v772 = vadd.f32 %v223, %v771
    %v773 = vpop.f32.mrb[0].mxu0
    %774 = vmatprep.mubr.bf16.mxu0 0
    %775 = vmatmul.mubr.bf16.gmra.mrb[0].mxu0 %v356
    %v776 = vpop.f32.mrb[0].mxu0
    %v777 = vadd.f32 %v223, %v776
    %v778 = vpop.f32.mrb[0].mxu0
    %v779 = vpop.f32.mrb[0].mxu0
    %v780 = vadd.f32 %v223, %v779
    %v781 = vpop.f32.mrb[0].mxu0
    %782 = vmatprep.mubr.bf16.mxu0 0
    %783 = vmatmul.mubr.bf16.gmra.mrb[0].mxu0 %v359
    %v784 = vpop.f32.mrb[0].mxu0
    %v785 = vadd.f32 %v223, %v784
    %v786 = vpop.f32.mrb[0].mxu0
    %v787 = vpop.f32.mrb[0].mxu0
    %v788 = vadd.f32 %v223, %v787
    %v789 = vpop.f32.mrb[0].mxu0
    %790 = vmatprep.mubr.bf16.mxu0 0
    %791 = vmatmul.mubr.bf16.gmra.mrb[0].mxu0 %v362
    %v792 = vpop.f32.mrb[0].mxu0
    %v793 = vadd.f32 %v223, %v792
    %v794 = vpop.f32.mrb[0].mxu0
    %v795 = vpop.f32.mrb[0].mxu0
    %v796 = vadd.f32 %v223, %v795
    %v797 = vpop.f32.mrb[0].mxu0
    %798 = vmatprep.mubr.bf16.mxu0 0
    %799 = vmatmul.mubr.bf16.gmra.mrb[0].mxu0 %v365
    %v800 = vpop.f32.mrb[0].mxu0
    %v801 = vadd.f32 %v223, %v800
    %v802 = vpop.f32.mrb[0].mxu0
    %v803 = vpop.f32.mrb[0].mxu0
    %v804 = vadd.f32 %v223, %v803
    %v805 = vpop.f32.mrb[0].mxu0
    %806 = vmatprep.mubr.bf16.mxu0 0
    %807 = vmatmul.mubr.bf16.gmra.mrb[0].mxu0 %v368
    %v808 = vpop.f32.mrb[0].mxu0
    %v809 = vadd.f32 %v223, %v808
    %v810 = vpop.f32.mrb[0].mxu0
    %v811 = vpop.f32.mrb[0].mxu0
    %v812 = vadd.f32 %v223, %v811
    %v813 = vpop.f32.mrb[0].mxu0
    %814 = vmatprep.mubr.bf16.mxu0 0
    %815 = vmatmul.mubr.bf16.gmra.mrb[0].mxu0 %v371
    %v816 = vpop.f32.mrb[0].mxu0
    %v817 = vadd.f32 %v223, %v816
    %v818 = vpop.f32.mrb[0].mxu0
    %v819 = vpop.f32.mrb[0].mxu0
    %v820 = vadd.f32 %v223, %v819
    %v821 = vpop.f32.mrb[0].mxu0
    %822 = vmatprep.mubr.bf16.mxu0 0
    %823 = vmatmul.mubr.bf16.gmra.mrb[0].mxu0 %v374
    %v824 = vpop.f32.mrb[0].mxu0
    %v825 = vadd.f32 %v223, %v824
    %v826 = vpop.f32.mrb[0].mxu0
    %v827 = vpop.f32.mrb[0].mxu0
    %v828 = vadd.f32 %v223, %v827
    %v829 = vpop.f32.mrb[0].mxu0
    %830 = vmatprep.mubr.bf16.mxu0 0
    %831 = vmatmul.mubr.bf16.gmra.mrb[0].mxu0 %v377
    %v832 = vpop.f32.mrb[0].mxu0
    %v833 = vadd.f32 %v223, %v832
    %v834 = vpop.f32.mrb[0].mxu0
    %v835 = vpop.f32.mrb[0].mxu0
    %v836 = vadd.f32 %v223, %v835
    %v837 = vpop.f32.mrb[0].mxu0
    %838 = vmatprep.mubr.bf16.mxu0 0
    %839 = vmatmul.mubr.bf16.gmra.mrb[0].mxu0 %v380
    %v840 = vpop.f32.mrb[0].mxu0
    %v841 = vadd.f32 %v223, %v840
    %v842 = vpop.f32.mrb[0].mxu0
    %v843 = vpop.f32.mrb[0].mxu0
    %v844 = vadd.f32 %v223, %v843
    %v845 = vpop.f32.mrb[0].mxu0
    %846 = vmatprep.mubr.bf16.mxu0 0
    %847 = vmatmul.mubr.bf16.gmra.mrb[0].mxu0 %v383
    %v848 = vpop.f32.mrb[0].mxu0
    %v849 = vadd.f32 %v223, %v848
    %v850 = vpop.f32.mrb[0].mxu0
    %v851 = vpop.f32.mrb[0].mxu0
    %v852 = vadd.f32 %v223, %v851
    %v853 = vpop.f32.mrb[0].mxu0
    %854 = vmatprep.mubr.bf16.mxu0 0
    %855 = vmatmul.mubr.bf16.gmra.mrb[0].mxu0 %v386
    %v856 = vpop.f32.mrb[0].mxu0
    %v857 = vadd.f32 %v223, %v856
    %v858 = vpop.f32.mrb[0].mxu0
    %v859 = vpop.f32.mrb[0].mxu0
    %v860 = vadd.f32 %v223, %v859
    %v861 = vpop.f32.mrb[0].mxu0
    %862 = vmatprep.mubr.bf16.mxu0 0
    %863 = vmatmul.mubr.bf16.gmra.mrb[0].mxu0 %v389
    %v864 = vpop.f32.mrb[0].mxu0
    %v865 = vadd.f32 %v223, %v864
    %v866 = vpop.f32.mrb[0].mxu0
    %v867 = vpop.f32.mrb[0].mxu0
    %v868 = vadd.f32 %v223, %v867
    %v869 = vpop.f32.mrb[0].mxu0
    %870 = vmatprep.mubr.bf16.mxu0 0
    %871 = vmatmul.mubr.bf16.gmra.mrb[0].mxu0 %v392
    %v872 = vpop.f32.mrb[0].mxu0
    %v873 = vadd.f32 %v223, %v872
    %v874 = vpop.f32.mrb[0].mxu0
    %v875 = vpop.f32.mrb[0].mxu0
    %v876 = vadd.f32 %v223, %v875
    %v877 = vpop.f32.mrb[0].mxu0
    %878 = vmatprep.mubr.bf16.mxu0 0
    %879 = vmatmul.mubr.bf16.gmra.mrb[0].mxu0 %v395
    %v880 = vpop.f32.mrb[0].mxu0
    %v881 = vadd.f32 %v223, %v880
    %v882 = vpop.f32.mrb[0].mxu0
    %v883 = vpop.f32.mrb[0].mxu0
    %v884 = vadd.f32 %v223, %v883
    %v885 = vpop.f32.mrb[0].mxu0
    %886 = vmatprep.mubr.bf16.mxu0 0
    %887 = vmatmul.mubr.bf16.gmra.mrb[0].mxu0 %v398
    %v888 = vpop.f32.mrb[0].mxu0
    %v889 = vadd.f32 %v223, %v888
    %v890 = vpop.f32.mrb[0].mxu0
    %v891 = vpop.f32.mrb[0].mxu0
    %v892 = vadd.f32 %v223, %v891
    %v893 = vpop.f32.mrb[0].mxu0
    %894 = vmatprep.mubr.bf16.mxu0 0
    %895 = vmatmul.mubr.bf16.gmra.mrb[0].mxu0 %v401
    %v896 = vpop.f32.mrb[0].mxu0
    %v897 = vadd.f32 %v223, %v896
    %v898 = vpop.f32.mrb[0].mxu0
    %v899 = vpop.f32.mrb[0].mxu0
    %v900 = vadd.f32 %v223, %v899
    %v901 = vpop.f32.mrb[0].mxu0
    %902 = vmatprep.mubr.bf16.mxu0 0
    %903 = vmatmul.mubr.bf16.gmra.mrb[0].mxu0 %v404
    %v904 = vpop.f32.mrb[0].mxu0
    %v905 = vadd.f32 %v223, %v904
    %v906 = vpop.f32.mrb[0].mxu0
    %v907 = vpop.f32.mrb[0].mxu0
    %v908 = vadd.f32 %v223, %v907
    %v909 = vpop.f32.mrb[0].mxu0
    %910 = vmatprep.mubr.bf16.mxu0 0
    %911 = vmatmul.mubr.bf16.gmra.mrb[0].mxu0 %v407
    %v912 = vpop.f32.mrb[0].mxu0
    %v913 = vadd.f32 %v223, %v912
    %v914 = vpop.f32.mrb[0].mxu0
    %v915 = vpop.f32.mrb[0].mxu0
    %v916 = vadd.f32 %v223, %v915
    %v917 = vpop.f32.mrb[0].mxu0
    %918 = vmatprep.mubr.bf16.mxu0 0
    %919 = vmatmul.mubr.bf16.gmra.mrb[0].mxu0 %v410
    %v920 = vpop.f32.mrb[0].mxu0
    %v921 = vadd.f32 %v223, %v920
    %v922 = vpop.f32.mrb[0].mxu0
    %v923 = vpop.f32.mrb[0].mxu0
    %v924 = vadd.f32 %v223, %v923
    %v925 = vpop.f32.mrb[0].mxu0
    %926 = vmatprep.mubr.bf16.mxu0 0
    %927 = vmatmul.mubr.bf16.gmra.mrb[0].mxu0 %v413
    %v928 = vpop.f32.mrb[0].mxu0
    %v929 = vadd.f32 %v223, %v928
    %v930 = vpop.f32.mrb[0].mxu0
    %v931 = vpop.f32.mrb[0].mxu0
    %v932 = vadd.f32 %v223, %v931
    %v933 = vpop.f32.mrb[0].mxu0
    %934 = vmatprep.mubr.bf16.mxu0 0
    %935 = vmatmul.mubr.bf16.gmra.mrb[0].mxu0 %v416
    %v936 = vpop.f32.mrb[0].mxu0
    %v937 = vadd.f32 %v223, %v936
    %v938 = vpop.f32.mrb[0].mxu0
    %v939 = vpop.f32.mrb[0].mxu0
    %v940 = vadd.f32 %v223, %v939
    %v941 = vpop.f32.mrb[0].mxu0
    %942 = vmatprep.mubr.bf16.mxu0 0
    %943 = vmatmul.mubr.bf16.gmra.mrb[0].mxu0 %v419
    %v944 = vpop.f32.mrb[0].mxu0
    %v945 = vadd.f32 %v223, %v944
    %v946 = vpop.f32.mrb[0].mxu0
    %v947 = vpop.f32.mrb[0].mxu0
    %v948 = vadd.f32 %v223, %v947
    %v949 = vpop.f32.mrb[0].mxu0
    %950 = vmatprep.mubr.bf16.mxu0 0
    %951 = vmatmul.mubr.bf16.gmra.mrb[0].mxu0 %v422
    %v952 = vpop.f32.mrb[0].mxu0
    %v953 = vadd.f32 %v223, %v952
    %v954 = vpop.f32.mrb[0].mxu0
    %v955 = vpop.f32.mrb[0].mxu0
    %v956 = vadd.f32 %v223, %v955
    %v957 = vpop.f32.mrb[0].mxu0
    %958 = vmatprep.mubr.bf16.mxu0 0
    %959 = vmatmul.mubr.bf16.gmra.mrb[0].mxu0 %v425
    %v960 = vpop.f32.mrb[0].mxu0
    %v961 = vadd.f32 %v223, %v960
    %v962 = vpop.f32.mrb[0].mxu0
    %v963 = vpop.f32.mrb[0].mxu0
    %v964 = vadd.f32 %v223, %v963
    %v965 = vpop.f32.mrb[0].mxu0
    %966 = vmatprep.mubr.bf16.mxu0 0
    %967 = vmatmul.mubr.bf16.gmra.mrb[0].mxu0 %v428
    %v968 = vpop.f32.mrb[0].mxu0
    %v969 = vadd.f32 %v223, %v968
    %v970 = vpop.f32.mrb[0].mxu0
    %v971 = vpop.f32.mrb[0].mxu0
    %v972 = vadd.f32 %v223, %v971
    %v973 = vpop.f32.mrb[0].mxu0
    %974 = vdwg.mxu0
    %v975 = vmax.f32 %v465, 0.0
    %v976 = vmax.f32 %v468, 0.0
    %v977 = vmax.f32 %v473, 0.0
    %v978 = vmax.f32 %v476, 0.0
    %v979 = vmax.f32 %v481, 0.0
    %v980 = vmax.f32 %v484, 0.0
    %v981 = vmax.f32 %v489, 0.0
    %v982 = vmax.f32 %v492, 0.0
    %v983 = vmax.f32 %v497, 0.0
    %v984 = vmax.f32 %v500, 0.0
    %v985 = vmax.f32 %v505, 0.0
    %v986 = vmax.f32 %v508, 0.0
    %v987 = vmax.f32 %v513, 0.0
    %v988 = vmax.f32 %v516, 0.0
    %v989 = vmax.f32 %v521, 0.0
    %v990 = vmax.f32 %v524, 0.0
    %v991 = vmax.f32 %v529, 0.0
    %v992 = vmax.f32 %v532, 0.0
    %v993 = vmax.f32 %v537, 0.0
    %v994 = vmax.f32 %v540, 0.0
    %v995 = vmax.f32 %v545, 0.0
    %v996 = vmax.f32 %v548, 0.0
    %v997 = vmax.f32 %v553, 0.0
    %v998 = vmax.f32 %v556, 0.0
    %v999 = vmax.f32 %v561, 0.0
    %v1000 = vmax.f32 %v564, 0.0
    %v1001 = vmax.f32 %v569, 0.0
    %v1002 = vmax.f32 %v572, 0.0
    %v1003 = vmax.f32 %v577, 0.0
    %v1004 = vmax.f32 %v580, 0.0
    %v1005 = vmax.f32 %v585, 0.0
    %v1006 = vmax.f32 %v588, 0.0
    %v1007 = vmax.f32 %v593, 0.0
    %v1008 = vmax.f32 %v596, 0.0
    %v1009 = vmax.f32 %v601, 0.0
    %v1010 = vmax.f32 %v604, 0.0
    %v1011 = vmax.f32 %v609, 0.0
    %v1012 = vmax.f32 %v612, 0.0
    %v1013 = vmax.f32 %v617, 0.0
    %v1014 = vmax.f32 %v620, 0.0
    %v1015 = vmax.f32 %v625, 0.0
    %v1016 = vmax.f32 %v628, 0.0
    %v1017 = vmax.f32 %v633, 0.0
    %v1018 = vmax.f32 %v636, 0.0
    %v1019 = vmax.f32 %v641, 0.0
    %v1020 = vmax.f32 %v644, 0.0
    %v1021 = vmax.f32 %v649, 0.0
    %v1022 = vmax.f32 %v652, 0.0
    %v1023 = vmax.f32 %v657, 0.0
    %v1024 = vmax.f32 %v660, 0.0
    %v1025 = vmax.f32 %v665, 0.0
    %v1026 = vmax.f32 %v668, 0.0
    %v1027 = vmax.f32 %v673, 0.0
    %v1028 = vmax.f32 %v676, 0.0
    %v1029 = vmax.f32 %v681, 0.0
    %v1030 = vmax.f32 %v684, 0.0
    %v1031 = vmax.f32 %v689, 0.0
    %v1032 = vmax.f32 %v692, 0.0
    %v1033 = vmax.f32 %v697, 0.0
    %v1034 = vmax.f32 %v700, 0.0
    %v1035 = vmax.f32 %v705, 0.0
    %v1036 = vmax.f32 %v708, 0.0
    %v1037 = vmax.f32 %v713, 0.0
    %v1038 = vmax.f32 %v716, 0.0
    %v1039 = vmax.f32 %v721, 0.0
    %v1040 = vmax.f32 %v724, 0.0
    %v1041 = vmax.f32 %v729, 0.0
    %v1042 = vmax.f32 %v732, 0.0
    %v1043 = vmax.f32 %v737, 0.0
    %v1044 = vmax.f32 %v740, 0.0
    %v1045 = vmax.f32 %v745, 0.0
    %v1046 = vmax.f32 %v748, 0.0
    %v1047 = vmax.f32 %v753, 0.0
    %v1048 = vmax.f32 %v756, 0.0
    %v1049 = vmax.f32 %v761, 0.0
    %v1050 = vmax.f32 %v764, 0.0
    %v1051 = vmax.f32 %v769, 0.0
    %v1052 = vmax.f32 %v772, 0.0
    %v1053 = vmax.f32 %v777, 0.0
    %v1054 = vmax.f32 %v780, 0.0
    %v1055 = vmax.f32 %v785, 0.0
    %v1056 = vmax.f32 %v788, 0.0
    %v1057 = vmax.f32 %v793, 0.0
    %v1058 = vmax.f32 %v796, 0.0
    %v1059 = vmax.f32 %v801, 0.0
    %v1060 = vmax.f32 %v804, 0.0
    %v1061 = vmax.f32 %v809, 0.0
    %v1062 = vmax.f32 %v812, 0.0
    %v1063 = vmax.f32 %v817, 0.0
    %v1064 = vmax.f32 %v820, 0.0
    %v1065 = vmax.f32 %v825, 0.0
    %v1066 = vmax.f32 %v828, 0.0
    %v1067 = vmax.f32 %v833, 0.0
    %v1068 = vmax.f32 %v836, 0.0
    %v1069 = vmax.f32 %v841, 0.0
    %v1070 = vmax.f32 %v844, 0.0
    %v1071 = vmax.f32 %v849, 0.0
    %v1072 = vmax.f32 %v852, 0.0
    %v1073 = vmax.f32 %v857, 0.0
    %v1074 = vmax.f32 %v860, 0.0
    %v1075 = vmax.f32 %v865, 0.0
    %v1076 = vmax.f32 %v868, 0.0
    %v1077 = vmax.f32 %v873, 0.0
    %v1078 = vmax.f32 %v876, 0.0
    %v1079 = vmax.f32 %v881, 0.0
    %v1080 = vmax.f32 %v884, 0.0
    %v1081 = vmax.f32 %v889, 0.0
    %v1082 = vmax.f32 %v892, 0.0
    %v1083 = vmax.f32 %v897, 0.0
    %v1084 = vmax.f32 %v900, 0.0
    %v1085 = vmax.f32 %v905, 0.0
    %v1086 = vmax.f32 %v908, 0.0
    %v1087 = vmax.f32 %v913, 0.0
    %v1088 = vmax.f32 %v916, 0.0
    %v1089 = vmax.f32 %v921, 0.0
    %v1090 = vmax.f32 %v924, 0.0
    %v1091 = vmax.f32 %v929, 0.0
    %v1092 = vmax.f32 %v932, 0.0
    %v1093 = vmax.f32 %v937, 0.0
    %v1094 = vmax.f32 %v940, 0.0
    %v1095 = vmax.f32 %v945, 0.0
    %v1096 = vmax.f32 %v948, 0.0
    %v1097 = vmax.f32 %v953, 0.0
    %v1098 = vmax.f32 %v956, 0.0
    %v1099 = vmax.f32 %v961, 0.0
    %v1100 = vmax.f32 %v964, 0.0
    %v1101 = vmax.f32 %v969, 0.0
    %v1102 = vmax.f32 %v972, 0.0
    %v1103 = vpack.c.bf16 %v976, %v975
    %v1104 = vpack.c.bf16 %v978, %v977
    %v1105 = vpack.c.bf16 %v980, %v979
    %v1106 = vpack.c.bf16 %v982, %v981
    %v1107 = vpack.c.bf16 %v984, %v983
    %v1108 = vpack.c.bf16 %v986, %v985
    %v1109 = vpack.c.bf16 %v988, %v987
    %v1110 = vpack.c.bf16 %v990, %v989
    %v1111 = vpack.c.bf16 %v992, %v991
    %v1112 = vpack.c.bf16 %v994, %v993
    %v1113 = vpack.c.bf16 %v996, %v995
    %v1114 = vpack.c.bf16 %v998, %v997
    %v1115 = vpack.c.bf16 %v1000, %v999
    %v1116 = vpack.c.bf16 %v1002, %v1001
    %v1117 = vpack.c.bf16 %v1004, %v1003
    %v1118 = vpack.c.bf16 %v1006, %v1005
    %v1119 = vpack.c.bf16 %v1008, %v1007
    %v1120 = vpack.c.bf16 %v1010, %v1009
    %v1121 = vpack.c.bf16 %v1012, %v1011
    %v1122 = vpack.c.bf16 %v1014, %v1013
    %v1123 = vpack.c.bf16 %v1016, %v1015
    %v1124 = vpack.c.bf16 %v1018, %v1017
    %v1125 = vpack.c.bf16 %v1020, %v1019
    %v1126 = vpack.c.bf16 %v1022, %v1021
    %v1127 = vpack.c.bf16 %v1024, %v1023
    %v1128 = vpack.c.bf16 %v1026, %v1025
    %v1129 = vpack.c.bf16 %v1028, %v1027
    %v1130 = vpack.c.bf16 %v1030, %v1029
    %v1131 = vpack.c.bf16 %v1032, %v1031
    %v1132 = vpack.c.bf16 %v1034, %v1033
    %v1133 = vpack.c.bf16 %v1036, %v1035
    %v1134 = vpack.c.bf16 %v1038, %v1037
    %v1135 = vpack.c.bf16 %v1040, %v1039
    %v1136 = vpack.c.bf16 %v1042, %v1041
    %v1137 = vpack.c.bf16 %v1044, %v1043
    %v1138 = vpack.c.bf16 %v1046, %v1045
    %v1139 = vpack.c.bf16 %v1048, %v1047
    %v1140 = vpack.c.bf16 %v1050, %v1049
    %v1141 = vpack.c.bf16 %v1052, %v1051
    %v1142 = vpack.c.bf16 %v1054, %v1053
    %v1143 = vpack.c.bf16 %v1056, %v1055
    %v1144 = vpack.c.bf16 %v1058, %v1057
    %v1145 = vpack.c.bf16 %v1060, %v1059
    %v1146 = vpack.c.bf16 %v1062, %v1061
    %v1147 = vpack.c.bf16 %v1064, %v1063
    %v1148 = vpack.c.bf16 %v1066, %v1065
    %v1149 = vpack.c.bf16 %v1068, %v1067
    %v1150 = vpack.c.bf16 %v1070, %v1069
    %v1151 = vpack.c.bf16 %v1072, %v1071
    %v1152 = vpack.c.bf16 %v1074, %v1073
    %v1153 = vpack.c.bf16 %v1076, %v1075
    %v1154 = vpack.c.bf16 %v1078, %v1077
    %v1155 = vpack.c.bf16 %v1080, %v1079
    %v1156 = vpack.c.bf16 %v1082, %v1081
    %v1157 = vpack.c.bf16 %v1084, %v1083
    %v1158 = vpack.c.bf16 %v1086, %v1085
    %v1159 = vpack.c.bf16 %v1088, %v1087
    %v1160 = vpack.c.bf16 %v1090, %v1089
    %v1161 = vpack.c.bf16 %v1092, %v1091
    %v1162 = vpack.c.bf16 %v1094, %v1093
    %v1163 = vpack.c.bf16 %v1096, %v1095
    %v1164 = vpack.c.bf16 %v1098, %v1097
    %v1165 = vpack.c.bf16 %v1100, %v1099
    %v1166 = vpack.c.bf16 %v1102, %v1101
    %v1167 = vld [vmem:[%s3] sm:$0x3]
    %v1168 = vld [vmem:[%s4] sm:$0xf]
    %1170 = vset.pattern.permute.xlu0 0
    %1171 = vperm.xlu0 %1170, %v1168
    %v1172 = vpop.permute.xlu0 %1171
    %1174 = vmatprep.subr.bf16.mxu0 0
    %1175 = vmatpush1.bf16.xpose.msra.mxu0 %v1103
    %1176 = vmatprep.subr.bf16.mxu0 0
    %1177 = vmatpush1.bf16.xpose.msra.mxu0 %v1104
    %1178 = vmatprep.subr.bf16.mxu0 0
    %1179 = vmatpush1.bf16.xpose.msra.mxu0 %v1105
    %1180 = vmatprep.subr.bf16.mxu0 0
    %1181 = vmatpush1.bf16.xpose.msra.mxu0 %v1106
    %1182 = vmatprep.subr.bf16.mxu0 0
    %1183 = vmatpush1.bf16.xpose.msra.mxu0 %v1107
    %1184 = vmatprep.subr.bf16.mxu0 0
    %1185 = vmatpush1.bf16.xpose.msra.mxu0 %v1108
    %1186 = vmatprep.subr.bf16.mxu0 0
    %1187 = vmatpush1.bf16.xpose.msra.mxu0 %v1109
    %1188 = vmatprep.subr.bf16.mxu0 0
    %1189 = vmatpush1.bf16.xpose.msra.mxu0 %v1110
    %1190 = vmatprep.subr.bf16.mxu0 0
    %1191 = vmatpush1.bf16.xpose.msra.mxu0 %v1111
    %1192 = vmatprep.subr.bf16.mxu0 0
    %1193 = vmatpush1.bf16.xpose.msra.mxu0 %v1112
    %1194 = vmatprep.subr.bf16.mxu0 0
    %1195 = vmatpush1.bf16.xpose.msra.mxu0 %v1113
    %1196 = vmatprep.subr.bf16.mxu0 0
    %1197 = vmatpush1.bf16.xpose.msra.mxu0 %v1114
    %1198 = vmatprep.subr.bf16.mxu0 0
    %1199 = vmatpush1.bf16.xpose.msra.mxu0 %v1115
    %1200 = vmatprep.subr.bf16.mxu0 0
    %1201 = vmatpush1.bf16.xpose.msra.mxu0 %v1116
    %1202 = vmatprep.subr.bf16.mxu0 0
    %1203 = vmatpush1.bf16.xpose.msra.mxu0 %v1117
    %1204 = vmatprep.subr.bf16.mxu0 0
    %1205 = vmatpush1.bf16.xpose.msra.mxu0 %v1118
    %1206 = vmatprep.mubr.bf16.mxu0 0
    %1207 = vmatmul.mubr.bf16.gmra.mrb[0].mxu0 %v1167
    %v1208 = vpop.f32.mrb[0].mxu0
    %v1209 = vadd.f32 %v1172, %v1208
    %v1210 = vpop.f32.mrb[0].mxu0
    %v1211 = vadd.f32 %v1172, %v1210
    %v1212 = vpop.f32.mrb[0].mxu0
    %v1213 = vpop.f32.mrb[0].mxu0
    %1214 = vdwg.mxu0
    %1215 = vmatprep.subr.bf16.mxu0 0
    %1216 = vmatpush1.bf16.xpose.msra.mxu0 %v1119
    %1217 = vmatprep.subr.bf16.mxu0 0
    %1218 = vmatpush1.bf16.xpose.msra.mxu0 %v1120
    %1219 = vmatprep.subr.bf16.mxu0 0
    %1220 = vmatpush1.bf16.xpose.msra.mxu0 %v1121
    %1221 = vmatprep.subr.bf16.mxu0 0
    %1222 = vmatpush1.bf16.xpose.msra.mxu0 %v1122
    %1223 = vmatprep.subr.bf16.mxu0 0
    %1224 = vmatpush1.bf16.xpose.msra.mxu0 %v1123
    %1225 = vmatprep.subr.bf16.mxu0 0
    %1226 = vmatpush1.bf16.xpose.msra.mxu0 %v1124
    %1227 = vmatprep.subr.bf16.mxu0 0
    %1228 = vmatpush1.bf16.xpose.msra.mxu0 %v1125
    %1229 = vmatprep.subr.bf16.mxu0 0
    %1230 = vmatpush1.bf16.xpose.msra.mxu0 %v1126
    %1231 = vmatprep.subr.bf16.mxu0 0
    %1232 = vmatpush1.bf16.xpose.msra.mxu0 %v1127
    %1233 = vmatprep.subr.bf16.mxu0 0
    %1234 = vmatpush1.bf16.xpose.msra.mxu0 %v1128
    %1235 = vmatprep.subr.bf16.mxu0 0
    %1236 = vmatpush1.bf16.xpose.msra.mxu0 %v1129
    %1237 = vmatprep.subr.bf16.mxu0 0
    %1238 = vmatpush1.bf16.xpose.msra.mxu0 %v1130
    %1239 = vmatprep.subr.bf16.mxu0 0
    %1240 = vmatpush1.bf16.xpose.msra.mxu0 %v1131
    %1241 = vmatprep.subr.bf16.mxu0 0
    %1242 = vmatpush1.bf16.xpose.msra.mxu0 %v1132
    %1243 = vmatprep.subr.bf16.mxu0 0
    %1244 = vmatpush1.bf16.xpose.msra.mxu0 %v1133
    %1245 = vmatprep.subr.bf16.mxu0 0
    %1246 = vmatpush1.bf16.xpose.msra.mxu0 %v1134
    %1247 = vmatprep.mubr.bf16.mxu0 0
    %1248 = vmatmul.mubr.bf16.gmra.mrb[0].mxu0 %v1167
    %v1249 = vpop.f32.mrb[0].mxu0
    %v1250 = vadd.f32 %v1172, %v1249
    %v1251 = vpop.f32.mrb[0].mxu0
    %v1252 = vadd.f32 %v1172, %v1251
    %v1253 = vpop.f32.mrb[0].mxu0
    %v1254 = vpop.f32.mrb[0].mxu0
    %1255 = vdwg.mxu0
    %1256 = vmatprep.subr.bf16.mxu0 0
    %1257 = vmatpush1.bf16.xpose.msra.mxu0 %v1135
    %1258 = vmatprep.subr.bf16.mxu0 0
    %1259 = vmatpush1.bf16.xpose.msra.mxu0 %v1136
    %1260 = vmatprep.subr.bf16.mxu0 0
    %1261 = vmatpush1.bf16.xpose.msra.mxu0 %v1137
    %1262 = vmatprep.subr.bf16.mxu0 0
    %1263 = vmatpush1.bf16.xpose.msra.mxu0 %v1138
    %1264 = vmatprep.subr.bf16.mxu0 0
    %1265 = vmatpush1.bf16.xpose.msra.mxu0 %v1139
    %1266 = vmatprep.subr.bf16.mxu0 0
    %1267 = vmatpush1.bf16.xpose.msra.mxu0 %v1140
    %1268 = vmatprep.subr.bf16.mxu0 0
    %1269 = vmatpush1.bf16.xpose.msra.mxu0 %v1141
    %1270 = vmatprep.subr.bf16.mxu0 0
    %1271 = vmatpush1.bf16.xpose.msra.mxu0 %v1142
    %1272 = vmatprep.subr.bf16.mxu0 0
    %1273 = vmatpush1.bf16.xpose.msra.mxu0 %v1143
    %1274 = vmatprep.subr.bf16.mxu0 0
    %1275 = vmatpush1.bf16.xpose.msra.mxu0 %v1144
    %1276 = vmatprep.subr.bf16.mxu0 0
    %1277 = vmatpush1.bf16.xpose.msra.mxu0 %v1145
    %1278 = vmatprep.subr.bf16.mxu0 0
    %1279 = vmatpush1.bf16.xpose.msra.mxu0 %v1146
    %1280 = vmatprep.subr.bf16.mxu0 0
    %1281 = vmatpush1.bf16.xpose.msra.mxu0 %v1147
    %1282 = vmatprep.subr.bf16.mxu0 0
    %1283 = vmatpush1.bf16.xpose.msra.mxu0 %v1148
    %1284 = vmatprep.subr.bf16.mxu0 0
    %1285 = vmatpush1.bf16.xpose.msra.mxu0 %v1149
    %1286 = vmatprep.subr.bf16.mxu0 0
    %1287 = vmatpush1.bf16.xpose.msra.mxu0 %v1150
    %1288 = vmatprep.mubr.bf16.mxu0 0
    %1289 = vmatmul.mubr.bf16.gmra.mrb[0].mxu0 %v1167
    %v1290 = vpop.f32.mrb[0].mxu0
    %v1291 = vadd.f32 %v1172, %v1290
    %v1292 = vpop.f32.mrb[0].mxu0
    %v1293 = vadd.f32 %v1172, %v1292
    %v1294 = vpop.f32.mrb[0].mxu0
    %v1295 = vpop.f32.mrb[0].mxu0
    %1296 = vdwg.mxu0
    %1297 = vmatprep.subr.bf16.mxu0 0
    %1298 = vmatpush1.bf16.xpose.msra.mxu0 %v1151
    %1299 = vmatprep.subr.bf16.mxu0 0
    %1300 = vmatpush1.bf16.xpose.msra.mxu0 %v1152
    %1301 = vmatprep.subr.bf16.mxu0 0
    %1302 = vmatpush1.bf16.xpose.msra.mxu0 %v1153
    %1303 = vmatprep.subr.bf16.mxu0 0
    %1304 = vmatpush1.bf16.xpose.msra.mxu0 %v1154
    %1305 = vmatprep.subr.bf16.mxu0 0
    %1306 = vmatpush1.bf16.xpose.msra.mxu0 %v1155
    %1307 = vmatprep.subr.bf16.mxu0 0
    %1308 = vmatpush1.bf16.xpose.msra.mxu0 %v1156
    %1309 = vmatprep.subr.bf16.mxu0 0
    %1310 = vmatpush1.bf16.xpose.msra.mxu0 %v1157
    %1311 = vmatprep.subr.bf16.mxu0 0
    %1312 = vmatpush1.bf16.xpose.msra.mxu0 %v1158
    %1313 = vmatprep.subr.bf16.mxu0 0
    %1314 = vmatpush1.bf16.xpose.msra.mxu0 %v1159
    %1315 = vmatprep.subr.bf16.mxu0 0
    %1316 = vmatpush1.bf16.xpose.msra.mxu0 %v1160
    %1317 = vmatprep.subr.bf16.mxu0 0
    %1318 = vmatpush1.bf16.xpose.msra.mxu0 %v1161
    %1319 = vmatprep.subr.bf16.mxu0 0
    %1320 = vmatpush1.bf16.xpose.msra.mxu0 %v1162
    %1321 = vmatprep.subr.bf16.mxu0 0
    %1322 = vmatpush1.bf16.xpose.msra.mxu0 %v1163
    %1323 = vmatprep.subr.bf16.mxu0 0
    %1324 = vmatpush1.bf16.xpose.msra.mxu0 %v1164
    %1325 = vmatprep.subr.bf16.mxu0 0
    %1326 = vmatpush1.bf16.xpose.msra.mxu0 %v1165
    %1327 = vmatprep.subr.bf16.mxu0 0
    %1328 = vmatpush1.bf16.xpose.msra.mxu0 %v1166
    %1329 = vmatprep.mubr.bf16.mxu0 0
    %1330 = vmatmul.mubr.bf16.gmra.mrb[0].mxu0 %v1167
    %v1331 = vpop.f32.mrb[0].mxu0
    %v1332 = vadd.f32 %v1172, %v1331
    %v1333 = vpop.f32.mrb[0].mxu0
    %v1334 = vadd.f32 %v1172, %v1333
    %v1335 = vpop.f32.mrb[0].mxu0
    %v1336 = vpop.f32.mrb[0].mxu0
    %1337 = vdwg.mxu0
    %v1346 = vcombine.low %v1209, %v1211
    %v1347 = vcombine.low %v1250, %v1252
    %v1348 = vcombine.low %v1291, %v1293
    %v1349 = vcombine.low %v1332, %v1334
    %1354 = vst [vmem:[#allocation2] sm:$0xff] %v1346
    %1355 = vst [vmem:[#allocation2 + $0x8] sm:$0xff] %v1347
    %1356 = vst [vmem:[#allocation2 + $0x10] sm:$0xff] %v1348
    %1357 = vst [vmem:[#allocation2 + $0x18] sm:$0xff] %v1349
    // Predicated region
    $region22: #{_node_classifier_head_impl.1} parent=1 // pred_check
      _
    $region23: #{_node_classifier_head_impl.1} parent=1 // pred_check_branch
      %1359 = sbr.rel (0) target = $region25
    $region24: #{_node_classifier_head_impl.1} parent=1 // pred_region
      %s1361 = ssub.s32 512, 512
      %1362 = vsyncadd [#allocation3], %s1361
      %s1364 = sshll.u32 [#allocation2], 4
      %s1365 = int_to_ptr.vmem [resolvable:$true] %s1364
      %1367 = dma.vmem_to_hbm [thread:$0]  %s1365, 512, %s5, [#allocation3]
    $region25: #{_node_classifier_head_impl.1} parent=1 // pred_fallthru
      _
    // Predicated region
    $region26: #{_node_classifier_head_impl.1} parent=1 // pred_check
      _
    $region27: #{_node_classifier_head_impl.1} parent=1 // pred_check_branch
      %1369 = sbr.rel (0) target = $region29
    $region28: #{_node_classifier_head_impl.1} parent=1 // pred_region
      %1370 = dma.done [#allocation3], 512
    $region29: #{_node_classifier_head_impl.1} parent=1 // pred_fallthru
      _
    %1371 = vsyncpa [#allocation3], 1

</llo_original>
